<compile_context>
chip_gen: v5e
topology: v5e:2x2
jax: 0.10.0
libtpu: 0.0.40
codegen_flags: <defaults>
</compile_context>

<pallas_src>
import numpy as np
import jax
import jax.numpy as jnp
from jax import lax
from jax.experimental import pallas as pl
from jax.experimental.pallas import tpu as pltpu

# Deterministic, in-script "tokenizer" config (BART-like special ids).
BOS = 0
PAD = 1
EOS = 2
SPECIAL = (BOS, PAD, EOS)
VOCAB = 50

_LANE = 128          # TPU lane width
_SRC_TILE = 128      # source-tile width for the monotonic (triangular-skip) scatter
_MAX_B_TILE = 32     # batch tile: amortizes per-grid-step overhead, feeds MXU rows
_MAX_HOIST_S = 1024  # hoist the (S,S) bf16 triangular matrix up to this S
                     # (<= 2 MiB; 4 MiB double-buffered — safe under every
                     # chip's scoped-VMEM default, including v5e's 16 MiB)


def _make_kernel(S, o_blk, hoist_tri, tiled_scatter):
    """Build the kernel body for one static configuration."""
    ST = _SRC_TILE

    def kernel(*refs):
        if hoist_tri:
            ids_ref, tri_ref, out_ref, len_ref, pos_sc, nkeep_sc = refs
        else:
            ids_ref, out_ref, len_ref, pos_sc, nkeep_sc = refs

        o = pl.program_id(1)
        ids = ids_ref[...]                     # (BT, S) int32, resident across o
        BT = ids.shape[0]
        OT = out_ref.shape[1]                  # == o_blk

        # ---- o == 0: 1-based destination slot of every kept token ----------
        @pl.when(o == 0)
        def _():
            keep = (ids != BOS) & (ids != PAD) & (ids != EOS)        # (BT, S)
            if S >= _LANE:
                # Inclusive prefix sum of `keep` as a bf16 MXU matmul with f32
                # accumulation (exact).  tri[k, j] = (k <= j), hoisted to the
                # wrapper when hoist_tri.
                if hoist_tri:
                    tri = tri_ref[...]
                else:
                    ii = lax.broadcasted_iota(jnp.int32, (S, S), 0)   # source k
                    jj = lax.broadcasted_iota(jnp.int32, (S, S), 1)   # position j
                    tri = (ii <= jj).astype(jnp.float32).astype(jnp.bfloat16)
                prefix = jnp.dot(
                    keep.astype(jnp.float32).astype(jnp.bfloat16), tri,
                    preferred_element_type=jnp.float32).astype(jnp.int32)
            else:
                # Tiny sequence: masked count on the VPU/XLU (MXU would be ~empty).
                jj3 = lax.broadcasted_iota(jnp.int32, (1, S, S), 1)   # position j
                kk3 = lax.broadcasted_iota(jnp.int32, (1, S, S), 2)   # source k
                contrib = (kk3 <= jj3) & keep[:, None, :]             # (BT, S, S)
                prefix = jnp.sum(contrib.astype(jnp.int32), axis=-1)  # (BT, S)

            pos_sc[...] = jnp.where(keep, prefix, 0)   # 0 -> never matches a slot
            nk = prefix[:, S - 1:S]                    # (BT, 1) total kept
            nkeep_sc[...] = nk
            len_ref[...] = jnp.broadcast_to(nk, len_ref.shape)

        # ---- every o: gather tokens whose slot falls in this output tile ---
        # 1-based slots covered by this tile (batch-invariant int32 iota).
        target = lax.broadcasted_iota(jnp.int32, (1, OT, 1), 1) + (o * OT + 1)

        if tiled_scatter:
            # Monotonicity: a token at source index k lands in slot <= k + 1,
            # so output tile o never needs source tiles before o*OT // ST.
            # Looping source tiles bounds the intermediate to (BT, OT, ST) and
            # skips the triangular-dead half of the O(S^2) compare/select.
            n_src = S // ST
            s_start = o * (OT // ST)

            def body(s, acc):
                start = pl.multiple_of(s * ST, ST)
                ids_t = ids_ref[:, pl.ds(start, ST)]          # (BT, ST)
                pos_t = pos_sc[:, pl.ds(start, ST)]           # (BT, ST)
                sel = pos_t[:, None, :] == target             # (BT, OT, ST)
                return acc + jnp.sum(jnp.where(sel, ids_t[:, None, :], 0), axis=-1)

            gathered = lax.fori_loop(s_start, n_src, body,
                                     jnp.zeros((BT, OT), jnp.int32))
        else:
            sel = pos_sc[...][:, None, :] == target            # (BT, OT, S)
            gathered = jnp.sum(jnp.where(sel, ids[:, None, :], 0), axis=-1)

        slot0 = lax.broadcasted_iota(jnp.int32, (1, OT), 1) + o * OT   # 0-based
        filled = slot0 < nkeep_sc[...]                                 # (BT, OT)
        out_ref[...] = jnp.where(filled, gathered, jnp.int32(PAD))

    return kernel


@jax.jit
def output_stripping(generated_ids):
    """generated_ids int [B, S] -> (stripped_ids int32 [B, S], lengths int32 [B])."""
    B, S = generated_ids.shape
    ids = generated_ids.astype(jnp.int32)

    # Batch tile: full batch when small, else 32 rows (multiple of 8).
    b_blk = B if B <= _MAX_B_TILE else _MAX_B_TILE

    # Output-slot tile: lane-dense (multiple of 128) unmasked stores; 256 when
    # it divides S to halve the inner grid length.
    if S < _LANE:
        o_blk = S
    elif S % 256 == 0:
        o_blk = 256
    else:
        o_blk = _LANE

    tiled_scatter = S >= _LANE and S % _SRC_TILE == 0
    hoist_tri = _LANE <= S <= _MAX_HOIST_S

    grid = (pl.cdiv(B, b_blk), pl.cdiv(S, o_blk))
    kernel = _make_kernel(S, o_blk, hoist_tri, tiled_scatter)

    in_specs = [pl.BlockSpec((b_blk, S), lambda b, o: (b, 0))]
    args = [ids]
    if hoist_tri:
        # Precompute the 0/1 triangular matrix once outside the kernel: removes
        # ~5*S^2 VPU ops (iotas, compare, casts) recomputed per batch tile.
        tri = (jnp.arange(S, dtype=jnp.int32)[:, None]
               <= jnp.arange(S, dtype=jnp.int32)[None, :]).astype(jnp.bfloat16)
        in_specs.append(pl.BlockSpec((S, S), lambda b, o: (0, 0)))
        args.append(tri)

    out, lens = pl.pallas_call(
        kernel,
        out_shape=(jax.ShapeDtypeStruct((B, S), jnp.int32),
                   jax.ShapeDtypeStruct((B, _LANE), jnp.int32)),
        grid=grid,
        in_specs=in_specs,
        out_specs=(pl.BlockSpec((b_blk, o_blk), lambda b, o: (b, o)),
                   pl.BlockSpec((b_blk, _LANE), lambda b, o: (b, 0))),
        scratch_shapes=[pltpu.VMEM((b_blk, S), jnp.int32),   # destination slots
                        pltpu.VMEM((b_blk, 1), jnp.int32)],  # kept counts
        # o carries pos_sc/nkeep_sc from o == 0, so it must stay "arbitrary";
        # batch tiles are independent -> "parallel" (megacore sharding).
        # TODO(synk): on v7x with B <= 8 one TC idles; making o parallel would
        # require recomputing the prefix sum every o step (see perf review).
        compiler_params=pltpu.CompilerParams(
            dimension_semantics=("parallel", "arbitrary")),
    )(*args)
    return out, lens[:, 0]


def _reference(ids_np, S):
    B = ids_np.shape[0]
    out = np.full((B, S), PAD, np.int32)
    lens = np.zeros((B,), np.int32)
    for b in range(B):
        kept = [int(t) for t in ids_np[b] if int(t) not in SPECIAL]
        out[b, :len(kept)] = kept
        lens[b] = len(kept)
    return out, lens


if __name__ == "__main__":
    key = jax.random.PRNGKey(0)

    def make_ids(k, B, S):
        ids = jax.random.randint(k, (B, S), minval=0, maxval=VOCAB, dtype=jnp.int32)
        # Make it look like generator output: BOS up front, EOS + PAD tail.
        ids = ids.at[:, 0].set(BOS)
        ids = ids.at[0, S - 3].set(EOS)
        ids = ids.at[0, S - 2:].set(PAD)
        ids = ids.at[1, S - 1].set(EOS)
        return ids

    # (2, 16): tiny VPU prefix-sum path.
    # (16, 384): hoisted-tri MXU prefix sum + monotonic source-tiled scatter path.
    for (B, S) in [(2, 16), (16, 384)]:
        key, sub = jax.random.split(key)
        ids = make_ids(sub, B, S)
        stripped, lengths = output_stripping(ids)
        stripped = jax.block_until_ready(stripped)
        lengths = jax.block_until_ready(lengths)

        ref_out, ref_len = _reference(np.asarray(ids), S)
        assert np.array_equal(np.asarray(stripped), ref_out), \
            f"token compaction mismatch (B={B}, S={S})"
        assert np.array_equal(np.asarray(lengths), ref_len), \
            f"length mismatch (B={B}, S={S})"

    print("KERNEL_OK")
</pallas_src>

<mosaic_0001>
module attributes {stable_mosaic.version = 11 : i64} {
  func.func @kernel(%arg0: i32, %arg1: i32, %arg2: memref<2x16xi32, #tpu.memory_space<vmem>>, %arg3: memref<2x16xi32, #tpu.memory_space<vmem>>, %arg4: memref<2x128xi32, #tpu.memory_space<vmem>>, %arg5: memref<2x16xi32, #tpu.memory_space<vmem>>, %arg6: memref<2x1xi32, #tpu.memory_space<vmem>>) attributes {dimension_semantics = [#tpu.dimension_semantics<parallel>, #tpu.dimension_semantics<arbitrary>], iteration_bounds = array<i64: 1, 1>, scalar_prefetch = 0 : i64, scratch_operands = 2 : i64, tpu.core_type = #tpu.core_type<tc>, window_params = [{transform_indices = @transform_0, window_bounds = array<i64: 2, 16>}, {transform_indices = @transform_1, window_bounds = array<i64: 2, 16>}, {transform_indices = @transform_2, window_bounds = array<i64: 2, 128>}]} {
    %c0 = arith.constant 0 : index
    %c0_0 = arith.constant 0 : index
    %0 = vector.load %arg2[%c0, %c0_0] : memref<2x16xi32, #tpu.memory_space<vmem>>, vector<2x16xi32>
    %c0_i32 = arith.constant 0 : i32
    %1 = arith.cmpi eq, %arg1, %c0_i32 : i32
    %2 = arith.extui %1 : i1 to i32
    %c0_i32_1 = arith.constant 0 : i32
    %3 = arith.cmpi ne, %2, %c0_i32_1 : i32
    scf.if %3 {
      %c0_i32_11 = arith.constant 0 : i32
      %31 = vector.broadcast %c0_i32_11 : i32 to vector<2x16xi32>
      %32 = arith.cmpi ne, %0, %31 : vector<2x16xi32>
      %c1_i32_12 = arith.constant 1 : i32
      %33 = vector.broadcast %c1_i32_12 : i32 to vector<2x16xi32>
      %34 = arith.cmpi ne, %0, %33 : vector<2x16xi32>
      %35 = arith.andi %32, %34 : vector<2x16xi1>
      %c2_i32 = arith.constant 2 : i32
      %36 = vector.broadcast %c2_i32 : i32 to vector<2x16xi32>
      %37 = arith.cmpi ne, %0, %36 : vector<2x16xi32>
      %38 = arith.andi %35, %37 : vector<2x16xi1>
      %39 = tpu.iota {dimensions = array<i32: 1>} : vector<1x16x16xi32>
      %40 = tpu.iota {dimensions = array<i32: 2>} : vector<1x16x16xi32>
      %41 = arith.cmpi sle, %40, %39 : vector<1x16x16xi32>
      %42 = vector.shape_cast %38 : vector<2x16xi1> to vector<2x1x16xi1>
      %43 = vector.broadcast %41 : vector<1x16x16xi1> to vector<2x16x16xi1>
      %44 = vector.broadcast %42 : vector<2x1x16xi1> to vector<2x16x16xi1>
      %45 = arith.andi %43, %44 : vector<2x16x16xi1>
      %46 = arith.extui %45 : vector<2x16x16xi1> to vector<2x16x16xi32>
      %cst_13 = arith.constant dense<0> : vector<2x16xi32>
      %47 = vector.multi_reduction <add>, %46, %cst_13 [2] : vector<2x16x16xi32> to vector<2x16xi32>
      %c0_i32_14 = arith.constant 0 : i32
      %48 = vector.broadcast %c0_i32_14 : i32 to vector<2x16xi32>
      %49 = arith.select %38, %47, %48 : vector<2x16xi1>, vector<2x16xi32>
      %c0_15 = arith.constant 0 : index
      %c0_16 = arith.constant 0 : index
      %50 = vector.load %arg5[%c0_15, %c0_16] : memref<2x16xi32, #tpu.memory_space<vmem>>, vector<2x16xi32>
      tpu.vector_store %arg5[%c0_15, %c0_16], %49 {strides = array<i32>} : memref<2x16xi32, #tpu.memory_space<vmem>>, vector<2x16xi32>,
      %51 = vector.extract_strided_slice %47 {offsets = [0, 15], sizes = [2, 1], strides = [1, 1]} : vector<2x16xi32> to vector<2x1xi32>
      %c0_17 = arith.constant 0 : index
      %c0_18 = arith.constant 0 : index
      %52 = vector.load %arg6[%c0_17, %c0_18] : memref<2x1xi32, #tpu.memory_space<vmem>>, vector<2x1xi32>
      tpu.vector_store %arg6[%c0_17, %c0_18], %51 {strides = array<i32>} : memref<2x1xi32, #tpu.memory_space<vmem>>, vector<2x1xi32>,
      %53 = vector.shape_cast %51 : vector<2x1xi32> to vector<2x1xi32>
      %54 = vector.broadcast %53 : vector<2x1xi32> to vector<2x128xi32>
      %c0_19 = arith.constant 0 : index
      %c0_20 = arith.constant 0 : index
      %55 = vector.load %arg4[%c0_19, %c0_20] : memref<2x128xi32, #tpu.memory_space<vmem>>, vector<2x128xi32>
      tpu.vector_store %arg4[%c0_19, %c0_20], %54 {strides = array<i32>} : memref<2x128xi32, #tpu.memory_space<vmem>>, vector<2x128xi32>,
    } else {
    }
    %4 = tpu.iota {dimensions = array<i32: 1>} : vector<1x16x1xi32>
    %c16_i32 = arith.constant 16 : i32
    %5 = arith.muli %arg1, %c16_i32 : i32
    %c1_i32 = arith.constant 1 : i32
    %6 = arith.addi %5, %c1_i32 : i32
    %7 = vector.broadcast %6 : i32 to vector<1x16x1xi32>
    %8 = arith.addi %4, %7 : vector<1x16x1xi32>
    %c0_2 = arith.constant 0 : index
    %c0_3 = arith.constant 0 : index
    %9 = vector.load %arg5[%c0_2, %c0_3] : memref<2x16xi32, #tpu.memory_space<vmem>>, vector<2x16xi32>
    %10 = vector.shape_cast %9 : vector<2x16xi32> to vector<2x1x16xi32>
    %11 = vector.broadcast %10 : vector<2x1x16xi32> to vector<2x16x16xi32>
    %12 = vector.broadcast %8 : vector<1x16x1xi32> to vector<2x16x16xi32>
    %13 = arith.cmpi eq, %11, %12 : vector<2x16x16xi32>
    %14 = vector.shape_cast %0 : vector<2x16xi32> to vector<2x1x16xi32>
    %c0_i32_4 = arith.constant 0 : i32
    %15 = vector.shape_cast %14 : vector<2x1x16xi32> to vector<2x1x16xi32>
    %16 = vector.broadcast %15 : vector<2x1x16xi32> to vector<2x16x16xi32>
    %17 = vector.broadcast %c0_i32_4 : i32 to vector<2x16x16xi32>
    %18 = arith.select %13, %16, %17 : vector<2x16x16xi1>, vector<2x16x16xi32>
    %cst = arith.constant dense<0> : vector<2x16xi32>
    %19 = vector.multi_reduction <add>, %18, %cst [2] : vector<2x16x16xi32> to vector<2x16xi32>
    %20 = tpu.iota {dimensions = array<i32: 1>} : vector<1x16xi32>
    %c16_i32_5 = arith.constant 16 : i32
    %21 = arith.muli %arg1, %c16_i32_5 : i32
    %22 = vector.broadcast %21 : i32 to vector<1x16xi32>
    %23 = arith.addi %20, %22 : vector<1x16xi32>
    %c0_6 = arith.constant 0 : index
    %c0_7 = arith.constant 0 : index
    %24 = vector.load %arg6[%c0_6, %c0_7] : memref<2x1xi32, #tpu.memory_space<vmem>>, vector<2x1xi32>
    %25 = vector.broadcast %23 : vector<1x16xi32> to vector<2x16xi32>
    %26 = vector.broadcast %24 : vector<2x1xi32> to vector<2x16xi32>
    %27 = arith.cmpi slt, %25, %26 : vector<2x16xi32>
    %c1_i32_8 = arith.constant 1 : i32
    %28 = vector.broadcast %c1_i32_8 : i32 to vector<2x16xi32>
    %29 = arith.select %27, %19, %28 : vector<2x16xi1>, vector<2x16xi32>
    %c0_9 = arith.constant 0 : index
    %c0_10 = arith.constant 0 : index
    %30 = vector.load %arg3[%c0_9, %c0_10] : memref<2x16xi32, #tpu.memory_space<vmem>>, vector<2x16xi32>
    tpu.vector_store %arg3[%c0_9, %c0_10], %29 {strides = array<i32>} : memref<2x16xi32, #tpu.memory_space<vmem>>, vector<2x16xi32>,
    return
  }
  func.func @transform_0(%arg0: i32, %arg1: i32) -> (i32, i32) {
    %c0_i32 = arith.constant 0 : i32
    %c0_i32_0 = arith.constant 0 : i32
    return %arg0, %c0_i32 : i32, i32
  }
  func.func @transform_1(%arg0: i32, %arg1: i32) -> (i32, i32) {
    %c0_i32 = arith.constant 0 : i32
    return %arg0, %arg1 : i32, i32
  }
  func.func @transform_2(%arg0: i32, %arg1: i32) -> (i32, i32) {
    %c0_i32 = arith.constant 0 : i32
    %c0_i32_0 = arith.constant 0 : i32
    return %arg0, %c0_i32 : i32, i32
  }
}

</mosaic_0001>

<llo_original>
// kernel: output_stripping.1
$region0: #{output_stripping.1}
  #allocation0 [shape = 'u32[]', space=smem, size = 0x4, offset = 0x4, fixed_abs, tag = 'smem constant byte address 0x4 - core index']
  #allocation1 [shape = 'u32[72,128]{1,0:T(1,128)}', space=vmem, size = 0x9000, scoped, tag = 'internal scratch']
  #allocation2 [shape = 's32[2,16]{1,0:T(2,128)}', space=vmem, size = 0x400, scoped, tag = 'scratch operand']
  #allocation3 [shape = 's32[2,1]{1,0:T(2,128)}', space=vmem, size = 0x400, scoped, tag = 'scratch operand']
  %s0 = inlined_call_operand.hbm [shape: s32[2,16], index: 0, kind: input, shape index: {}]
  %s1 = inlined_call_operand.hbm [shape: s32[2,16], index: 1, kind: output, shape index: {0}]
  %s2 = inlined_call_operand.vmem [shape: s32[2,128], index: 2, kind: output, shape index: {1}]
  %3 = xla_tuple %s1, %s2
  %s4 = sld [smem:[#allocation0]]
  $region30: #{output_stripping.1} parent=0
    _
  %s6 = ssub.s32 1, %s4
  %s7 = scalar_select 0, %s6, %s4
  $region1: #{output_stripping.1} parent=0
    #allocation4 [shape = 'u8[1024]{0}', space=vmem, size = 0x400, scoped, tag = 'input window, operand 0, single buffered']
    #allocation5 [shape = 's32[1]{0}', space=sflag, size = 0x4, scoped, tag = 'scoped memory for output_stripping.1']
    #allocation6 [shape = 's32[1]{0}', space=sflag, size = 0x4, scoped, tag = 'scoped memory for output_stripping.1']
    #allocation7 [shape = 'u8[1024]{0}', space=vmem, size = 0x400, scoped, tag = 'output window, operand 0, single buffered']
    %8 = vsyncpa [#allocation5], 0
    %9 = vsyncpa [#allocation6], 0
    // Predicated region
    $region2: #{output_stripping.1} parent=1 // pred_check
      _
    $region3: #{output_stripping.1} parent=1 // pred_check_branch
      %11 = sbr.rel (0) target = $region5
    $region4: #{output_stripping.1} parent=1 // pred_region
      %13 = vsyncadd [#allocation5], 0
      %s15 = sshll.u32 %s0, 4
      %s16 = int_to_ptr.hbm [resolvable:$true] %s15
      %s17 = sshll.u32 [#allocation4], 4
      %s18 = int_to_ptr.vmem [resolvable:$true] %s17
      %20 = dma.hbm_to_vmem [thread:$0]  %s16, 32, %s18, [#allocation5]
    $region5: #{output_stripping.1} parent=1 // pred_fallthru
      _
    // Predicated region
    $region6: #{output_stripping.1} parent=1 // pred_check
      _
    $region7: #{output_stripping.1} parent=1 // pred_check_branch
      %22 = sbr.rel (0) target = $region9
    $region8: #{output_stripping.1} parent=1 // pred_region
      %24 = dma.done [#allocation5], 32
    $region9: #{output_stripping.1} parent=1 // pred_fallthru
      _
    %v25 = vld [vmem:[#allocation4] sm:$0x3]
    %p26 = scmp.eq.s32.totalorder 0, 0
    // Predicated region
    $region10: #{output_stripping.1} parent=1 // pred_check
      %p27 = pneg %p26
    $region11: #{output_stripping.1} parent=1 // pred_check_branch
      %29 = sbr.rel (%p27) target = $region13
    $region12: #{output_stripping.1} parent=1 // pred_region
      %vm30 = vcmp.ne.s32.totalorder %v25, 0
      %vm31 = vcmp.ne.s32.totalorder %v25, 1
      %vm32 = vmand %vm30, %vm31
      %vm33 = vcmp.ne.s32.totalorder %v25, 2
      %vm34 = vmand %vm32, %vm33
      %v35 = vlaneseq
      %v36 = vshrl.u32 %v35, 7
      %v37 = vadd.s32 %v36, 8
      %v38 = vlaneseq
      %v39 = vand.u32 %v38, 127
      %vm40 = vcmp.le.s32.totalorder %v39, %v36
      %vm41 = vcmp.le.s32.totalorder %v39, %v37
      %v42 = vsel %vm34, 1, 0
      %v43 = vrot.slane %v42, 1
      %vm44 = vcmp.ne.s32.totalorder %v43, 0
      %v45 = vsel %vm40, 1, 0
      %v46 = vsel %vm41, 1, 0
      %vm47 = vcmp.eq.s32.totalorder %v45, 1
      %vm48 = vcmp.eq.s32.totalorder %v46, 1
      %v49 = vsel %vm44, 1, 0
      %v50 = vperm.slane %v42, 0
      %v51 = vperm.slane %v49, 0
      %vm52 = vcmp.eq.s32.totalorder %v50, 1
      %vm53 = vcmp.eq.s32.totalorder %v51, 1
      %vm54 = vmand %vm47, %vm52
      %vm55 = vmand %vm48, %vm52
      %vm56 = vmand %vm47, %vm53
      %vm57 = vmand %vm48, %vm53
      %v58 = vsel %vm54, 1, 0
      %v59 = vsel %vm55, 1, 0
      %v60 = vsel %vm56, 1, 0
      %v61 = vsel %vm57, 1, 0
      %vm62 = vcmask 130048
      %v63 = vsel %vm62, %v58, 0
      %v64 = vand.u32 %v63, 65535
      %v65 = vshrl.u32 %v63, 16
      %v66 = vcvt.s32.f32 %v64
      %v67 = vcvt.s32.f32 %v65
      %68 = vadd.xlane.f32.xlu0 %v66
      %v69 = vpop.xlane.xlu0 %68
      %70 = vadd.xlane.f32.xlu0 %v67
      %v71 = vpop.xlane.xlu0 %70
      %v72 = vcvt.f32.s32 %v69
      %v73 = vcvt.f32.s32 %v71
      %v74 = vshll.u32 %v73, 16
      %v75 = vadd.s32 %v74, %v72
      %v76 = vsel %vm62, %v59, 0
      %v77 = vand.u32 %v76, 65535
      %v78 = vshrl.u32 %v76, 16
      %v79 = vcvt.s32.f32 %v77
      %v80 = vcvt.s32.f32 %v78
      %81 = vadd.xlane.f32.xlu0 %v79
      %v82 = vpop.xlane.xlu0 %81
      %83 = vadd.xlane.f32.xlu0 %v80
      %v84 = vpop.xlane.xlu0 %83
      %v85 = vcvt.f32.s32 %v82
      %v86 = vcvt.f32.s32 %v84
      %v87 = vshll.u32 %v86, 16
      %v88 = vadd.s32 %v87, %v85
      %v89 = vsel %vm62, %v60, 0
      %v90 = vand.u32 %v89, 65535
      %v91 = vshrl.u32 %v89, 16
      %v92 = vcvt.s32.f32 %v90
      %v93 = vcvt.s32.f32 %v91
      %94 = vadd.xlane.f32.xlu0 %v92
      %v95 = vpop.xlane.xlu0 %94
      %96 = vadd.xlane.f32.xlu0 %v93
      %v97 = vpop.xlane.xlu0 %96
      %v98 = vcvt.f32.s32 %v95
      %v99 = vcvt.f32.s32 %v97
      %v100 = vshll.u32 %v99, 16
      %v101 = vadd.s32 %v100, %v98
      %v102 = vsel %vm62, %v61, 0
      %v103 = vand.u32 %v102, 65535
      %v104 = vshrl.u32 %v102, 16
      %v105 = vcvt.s32.f32 %v103
      %v106 = vcvt.s32.f32 %v104
      %107 = vadd.xlane.f32.xlu0 %v105
      %v108 = vpop.xlane.xlu0 %107
      %109 = vadd.xlane.f32.xlu0 %v106
      %v110 = vpop.xlane.xlu0 %109
      %v111 = vcvt.f32.s32 %v108
      %v112 = vcvt.f32.s32 %v110
      %v113 = vshll.u32 %v112, 16
      %v114 = vadd.s32 %v113, %v111
      %v115 = vperm.slane %v75, %v39
      %v116 = vadd.s32 %v39, 4294967288
      %v117 = vperm.slane %v88, %v116
      %vm118 = vcmask 130112
      %v119 = vsel %vm118, %v117, %v115
      %v120 = vperm.slane %v101, %v39
      %v121 = vperm.slane %v114, %v116
      %v122 = vsel %vm118, %v121, %v120
      %vm123 = vcmask 1041409
      %v124 = vsel %vm123, %v122, %v119
      %v125 = vsel %vm34, %v124, 0
      %vm126 = vcmask 123904
      %127 = vst.msk [vmem:[#allocation2] sm:$0x3] %vm126, %v125
      %v128 = vrot.slane %v114, 7
      %vm129 = vcmask 7175
      %130 = vst.msk [vmem:[#allocation3 - $0x7] sm:$0x80] %vm129, %v88
      %vm131 = vcmask 0
      %132 = vst.msk [vmem:[#allocation3 + $0x1] sm:$0x1] %vm131, %v128
      %v133 = vperm.slane %v88, 7
      %v134 = vperm.slane %v114, 7
      %v135 = vsel %vm123, %v134, %v133
      %136 = vst [vmem:[%s2] sm:$0x3] %v135
    $region13: #{output_stripping.1} parent=1 // pred_fallthru
      _
    %v137 = vlaneseq
    %v138 = vshrl.u32 %v137, 7
    %v139 = vadd.s32 %v138, 8
    %s140 = smul.u32 0, 16
    %s141 = sadd.s32 %s140, 1
    %v142 = vstv %s141
    %v143 = vadd.s32 %v138, %v142
    %v144 = vadd.s32 %v139, %v142
    %v145 = vld [vmem:[#allocation2] sm:$0x3]
    %v146 = vrot.slane %v145, 1
    %v147 = vperm.slane %v145, 0
    %v148 = vperm.slane %v146, 0
    %vm149 = vcmp.eq.s32.totalorder %v147, %v143
    %vm150 = vcmp.eq.s32.totalorder %v147, %v144
    %vm151 = vcmp.eq.s32.totalorder %v148, %v143
    %vm152 = vcmp.eq.s32.totalorder %v148, %v144
    %v153 = vrot.slane %v25, 1
    %v154 = vperm.slane %v25, 0
    %v155 = vperm.slane %v153, 0
    %v156 = vsel %vm149, %v154, 0
    %v157 = vsel %vm150, %v154, 0
    %v158 = vsel %vm151, %v155, 0
    %v159 = vsel %vm152, %v155, 0
    %vm160 = vcmask 130048
    %v161 = vsel %vm160, %v156, 0
    %v162 = vand.u32 %v161, 65535
    %v163 = vshrl.u32 %v161, 16
    %v164 = vcvt.s32.f32 %v162
    %v165 = vcvt.s32.f32 %v163
    %166 = vadd.xlane.f32.xlu0 %v164
    %v167 = vpop.xlane.xlu0 %166
    %168 = vadd.xlane.f32.xlu0 %v165
    %v169 = vpop.xlane.xlu0 %168
    %v170 = vcvt.f32.s32 %v167
    %v171 = vcvt.f32.s32 %v169
    %v172 = vshll.u32 %v171, 16
    %v173 = vadd.s32 %v172, %v170
    %v174 = vsel %vm160, %v157, 0
    %v175 = vand.u32 %v174, 65535
    %v176 = vshrl.u32 %v174, 16
    %v177 = vcvt.s32.f32 %v175
    %v178 = vcvt.s32.f32 %v176
    %179 = vadd.xlane.f32.xlu0 %v177
    %v180 = vpop.xlane.xlu0 %179
    %181 = vadd.xlane.f32.xlu0 %v178
    %v182 = vpop.xlane.xlu0 %181
    %v183 = vcvt.f32.s32 %v180
    %v184 = vcvt.f32.s32 %v182
    %v185 = vshll.u32 %v184, 16
    %v186 = vadd.s32 %v185, %v183
    %v187 = vsel %vm160, %v158, 0
    %v188 = vand.u32 %v187, 65535
    %v189 = vshrl.u32 %v187, 16
    %v190 = vcvt.s32.f32 %v188
    %v191 = vcvt.s32.f32 %v189
    %192 = vadd.xlane.f32.xlu0 %v190
    %v193 = vpop.xlane.xlu0 %192
    %194 = vadd.xlane.f32.xlu0 %v191
    %v195 = vpop.xlane.xlu0 %194
    %v196 = vcvt.f32.s32 %v193
    %v197 = vcvt.f32.s32 %v195
    %v198 = vshll.u32 %v197, 16
    %v199 = vadd.s32 %v198, %v196
    %v200 = vsel %vm160, %v159, 0
    %v201 = vand.u32 %v200, 65535
    %v202 = vshrl.u32 %v200, 16
    %v203 = vcvt.s32.f32 %v201
    %v204 = vcvt.s32.f32 %v202
    %205 = vadd.xlane.f32.xlu0 %v203
    %v206 = vpop.xlane.xlu0 %205
    %207 = vadd.xlane.f32.xlu0 %v204
    %v208 = vpop.xlane.xlu0 %207
    %v209 = vcvt.f32.s32 %v206
    %v210 = vcvt.f32.s32 %v208
    %v211 = vshll.u32 %v210, 16
    %v212 = vadd.s32 %v211, %v209
    %v213 = vlaneseq
    %v214 = vand.u32 %v213, 127
    %v215 = vstv %s140
    %v216 = vadd.s32 %v214, %v215
    %v217 = vld [vmem:[#allocation3] sm:$0x3]
    %218 = vset.pattern.permute.xlu0 0
    %219 = vperm.xlu0 %218, %v217
    %v220 = vpop.permute.xlu0 %219
    %vm221 = vcmp.lt.s32.totalorder %v216, %v220
    %v222 = vperm.slane %v173, %v214
    %v223 = vadd.s32 %v214, 4294967288
    %v224 = vperm.slane %v186, %v223
    %vm225 = vcmask 130112
    %v226 = vsel %vm225, %v224, %v222
    %v227 = vperm.slane %v199, %v214
    %v228 = vperm.slane %v212, %v223
    %v229 = vsel %vm225, %v228, %v227
    %vm230 = vcmask 1041409
    %v231 = vsel %vm230, %v229, %v226
    %v232 = vsel %vm221, %v231, 1
    %vm233 = vcmask 123904
    %234 = vst.msk [vmem:[#allocation7] sm:$0x3] %vm233, %v232
    // Predicated region
    $region14: #{output_stripping.1} parent=1 // pred_check
      _
    $region15: #{output_stripping.1} parent=1 // pred_check_branch
      %236 = sbr.rel (0) target = $region17
    $region16: #{output_stripping.1} parent=1 // pred_region
      %238 = vsyncadd [#allocation6], 0
      %s240 = sshll.u32 [#allocation7], 4
      %s241 = int_to_ptr.vmem [resolvable:$true] %s240
      %s242 = sshll.u32 %s1, 4
      %s243 = int_to_ptr.hbm [resolvable:$true] %s242
      %245 = dma.vmem_to_hbm [thread:$0]  %s241, 32, %s243, [#allocation6]
    $region17: #{output_stripping.1} parent=1 // pred_fallthru
      _
    // Predicated region
    $region18: #{output_stripping.1} parent=1 // pred_check
      _
    $region19: #{output_stripping.1} parent=1 // pred_check_branch
      %247 = sbr.rel (0) target = $region21
    $region20: #{output_stripping.1} parent=1 // pred_region
      _
    $region21: #{output_stripping.1} parent=1 // pred_fallthru
      _
    // Predicated region
    $region22: #{output_stripping.1} parent=1 // pred_check
      _
    $region23: #{output_stripping.1} parent=1 // pred_check_branch
      %249 = sbr.rel (0) target = $region25
    $region24: #{output_stripping.1} parent=1 // pred_region
      %251 = dma.done [#allocation6], 32
    $region25: #{output_stripping.1} parent=1 // pred_fallthru
      _
    // Predicated region
    $region26: #{output_stripping.1} parent=1 // pred_check
      _
    $region27: #{output_stripping.1} parent=1 // pred_check_branch
      %253 = sbr.rel (0) target = $region29
    $region28: #{output_stripping.1} parent=1 // pred_region
      _
    $region29: #{output_stripping.1} parent=1 // pred_fallthru
      _
    %254 = vsyncpa [#allocation5], 1
    %255 = vsyncpa [#allocation6], 1

</llo_original>
